<compile_context>
chip_gen: v5e
topology: v5e:2x2
jax: 0.10.0
libtpu: 0.0.40
codegen_flags: <defaults>
</compile_context>

<pallas_src>
import functools

import jax
import jax.numpy as jnp
from jax.experimental import pallas as pl
from jax.experimental.pallas import tpu as pltpu


# ---------------------------------------------------------------------------
# Fused kernel: both Q-heads of the Critic.
#
#   q_k(x) = cat([h2_k, x]) @ W2_k + b2_k
#   h2_k   = relu(cat([h1_k, x]) @ W1_k + b1_k)
#   h1_k   = relu(x @ W0_k + b0_k),      x = cat([state, action])
#
# Packing (done once, host side):
#   wx  = [W0_1 | W0_2 | W1x_1 | W1x_2]   (in_dim, 2*H1+2*H2)   bf16
#   bx  = [b0_1 | b0_2 | b1_1  | b1_2 ]   (1, 2*H1+2*H2)        f32
#   w1h1, w1h2                            (H1, H2)              bf16
#   w2h_rows = [w2h_1^T ; w2h_2^T]        (2, H2)               f32
#   w2x_rows = [w2x_1^T ; w2x_2^T]        (2, in_dim)           f32
#   b2       = [b2_1 | b2_2]              (1, 2)                f32
# ---------------------------------------------------------------------------
def _critic_kernel(x_ref, wx_ref, bx_ref, w1h1_ref, w1h2_ref,
                   w2h_ref, w2x_ref, b2_ref, q_ref, *, h1, h2):
    x = x_ref[...]                                              # (Bb, in) f32
    xb = x.astype(jnp.bfloat16)

    # one wide MXU push for every x-path projection of both heads (+ biases)
    xp = (jnp.dot(xb, wx_ref[...], preferred_element_type=jnp.float32)
          + bx_ref[...])                                        # (Bb, 2h1+2h2)

    # layer 0 (both heads): static 128-lane-aligned slices of xp
    h1a = jnp.maximum(xp[:, 0:h1], 0.0)                         # head-1 (Bb, h1)
    h1b = jnp.maximum(xp[:, h1:2 * h1], 0.0)                    # head-2 (Bb, h1)

    # layer 1 (both heads): bf16 h-path matmul + precomputed x-path + bias
    o1 = 2 * h1
    g1 = jnp.maximum(
        jnp.dot(h1a.astype(jnp.bfloat16), w1h1_ref[...],
                preferred_element_type=jnp.float32)
        + xp[:, o1:o1 + h2], 0.0)                               # (Bb, h2)
    g2 = jnp.maximum(
        jnp.dot(h1b.astype(jnp.bfloat16), w1h2_ref[...],
                preferred_element_type=jnp.float32)
        + xp[:, o1 + h2:o1 + 2 * h2], 0.0)                      # (Bb, h2)

    # final layer (N=1): pure f32 VPU multiply + XLU lane reductions
    w2h = w2h_ref[...]                                          # (2, h2)  f32
    w2x = w2x_ref[...]                                          # (2, in)  f32
    q1 = (jnp.sum(g1 * w2h[0:1, :], axis=-1, keepdims=True)
          + jnp.sum(x * w2x[0:1, :], axis=-1, keepdims=True))   # (Bb, 1)
    q2 = (jnp.sum(g2 * w2h[1:2, :], axis=-1, keepdims=True)
          + jnp.sum(x * w2x[1:2, :], axis=-1, keepdims=True))   # (Bb, 1)

    # lane-index select instead of concatenating 1-lane slivers
    lane = jax.lax.broadcasted_iota(jnp.int32, q_ref.shape, 1)
    q_ref[...] = (jnp.where(lane == 0, q1, q2)
                  + b2_ref[...]).astype(q_ref.dtype)


# ---------------------------------------------------------------------------
# Wrapper
# ---------------------------------------------------------------------------
def _detect_v7x():
    try:
        kind = jax.devices()[0].device_kind.lower()
    except Exception:
        return False
    return ("v7" in kind) or ("7x" in kind)


def _auto_block_b(batch, is_v7x):
    """None => gridless (everything resident in VMEM for one call)."""
    if is_v7x:
        if batch >= 1024:
            # split the batch across both TensorCores; multiple of 256, <=2048
            half = -(-(batch // 2) // 256) * 256
            return min(2048, max(256, half))
        return None
    # single TensorCore (v5e / v6e): a batch grid is just a serial loop
    return None if batch <= 2048 else 2048


def critic_forward_pallas(state, action, packed, hidden=(256, 256),
                          block_b=None):
    """Fused critic forward. Returns (q1, q2), each (B, 1) float32."""
    wx, bx, w1h1, w1h2, w2h_rows, w2x_rows, b2 = packed
    h1, h2 = hidden
    batch = state.shape[0]
    ntot = bx.shape[1]

    # single host-side concat (B*64 bytes) -> one K=in_dim matmul in-kernel
    x = jnp.concatenate([state, action], axis=1).astype(jnp.float32)
    in_dim = x.shape[1]

    is_v7x = _detect_v7x()
    if block_b is None:
        block_b = _auto_block_b(batch, is_v7x)
    if block_b is not None:
        block_b = max(8, (int(block_b) // 8) * 8)   # keep sublane-aligned

    kernel = functools.partial(_critic_kernel, h1=h1, h2=h2)

    flops = int(2 * batch * (in_dim * ntot + 2 * h1 * h2
                             + 2 * (h2 + in_dim)))
    weight_bytes = int(sum(int(p.size) * p.dtype.itemsize for p in packed))
    bytes_accessed = int(x.size * 4 + weight_bytes + batch * 2 * 4)
    cost = pl.CostEstimate(flops=flops, transcendentals=0,
                           bytes_accessed=bytes_accessed)

    # VMEM budget: ~ (xp + h1a/h1b + g1/g2 + x + q) per row, plus 2x weights
    rows_live = batch if (block_b is None or block_b >= batch) else block_b
    per_row = 4 * (ntot + 2 * h1 + 2 * h2 + 2 * in_dim + 8)
    est = int(1.5 * (rows_live * per_row + 2 * weight_bytes))
    cap = (56 << 20) if is_v7x else (96 << 20)      # 64 MiB vs 128 MiB parts
    vmem_limit = int(min(cap, max(32 << 20, est)))

    if block_b is None or block_b >= batch:
        # --- gridless path: one launch, everything resident in VMEM ---------
        vmem = pl.BlockSpec(memory_space=pltpu.MemorySpace.VMEM)
        q = pl.pallas_call(
            kernel,
            out_shape=jax.ShapeDtypeStruct((batch, 2), jnp.float32),
            in_specs=[vmem] * 8,
            out_specs=vmem,
            compiler_params=pltpu.CompilerParams(
                vmem_limit_bytes=vmem_limit),
            cost_estimate=cost,
        )(x, wx, bx, w1h1, w1h2, w2h_rows, w2x_rows, b2)
        return q[:, 0:1], q[:, 1:2]

    # --- gridded path: tile the batch, weights resident via constant map ----
    n_blocks = pl.cdiv(batch, block_b)
    b_pad = n_blocks * block_b
    x_p = x if b_pad == batch else jnp.pad(x, ((0, b_pad - batch), (0, 0)))

    rep = lambda i: (0, 0)
    in_specs = [
        pl.BlockSpec((block_b, in_dim), lambda i: (i, 0)),
        pl.BlockSpec((in_dim, ntot), rep),
        pl.BlockSpec((1, ntot), rep),
        pl.BlockSpec((h1, h2), rep),
        pl.BlockSpec((h1, h2), rep),
        pl.BlockSpec((2, h2), rep),
        pl.BlockSpec((2, in_dim), rep),
        pl.BlockSpec((1, 2), rep),
    ]

    def _run(sem):
        return pl.pallas_call(
            kernel,
            out_shape=jax.ShapeDtypeStruct((b_pad, 2), jnp.float32),
            grid=(n_blocks,),
            in_specs=in_specs,
            out_specs=pl.BlockSpec((block_b, 2), lambda i: (i, 0)),
            compiler_params=pltpu.CompilerParams(
                dimension_semantics=(sem,),
                vmem_limit_bytes=vmem_limit),
            cost_estimate=cost,
        )(x_p, wx, bx, w1h1, w1h2, w2h_rows, w2x_rows, b2)

    try:
        # CORE_PARALLEL actually engages v7x's second TensorCore
        # ("parallel" alone is measured as a near no-op).
        q = _run(pltpu.CORE_PARALLEL if is_v7x else pltpu.PARALLEL)
    except Exception:
        q = _run(pltpu.PARALLEL)

    q = q[:batch]
    return q[:, 0:1], q[:, 1:2]


# ---------------------------------------------------------------------------
# Parameter construction (deterministic, PyTorch-Linear-like uniform init)
# ---------------------------------------------------------------------------
def _linear_init(key, fan_in, fan_out):
    kw, kb = jax.random.split(key)
    bound = 1.0 / jnp.sqrt(jnp.asarray(fan_in, jnp.float32))
    w = jax.random.uniform(kw, (fan_in, fan_out), jnp.float32, -bound, bound)
    b = jax.random.uniform(kb, (1, fan_out), jnp.float32, -bound, bound)
    return w, b


def make_q_params(key, in_dim, hidden=(256, 256)):
    h1, h2 = hidden
    k0, k1, k2 = jax.random.split(key, 3)
    w0, b0 = _linear_init(k0, in_dim, h1)                  # fc0: (in, h1)
    w1, b1 = _linear_init(k1, h1 + in_dim, h2)             # fc1: (h1+in, h2)
    w1h, w1x = w1[:h1], w1[h1:]
    w2, b2 = _linear_init(k2, h2 + in_dim, 1)              # fc2: (h2+in, 1)
    w2h, w2x = w2[:h2], w2[h2:]
    return (w0, b0, w1h, w1x, b1, w2h, w2x, b2)


def pack_critic_params(q1_params, q2_params):
    """Pack both heads into the fused-kernel layout (done once, host side)."""
    w0_1, b0_1, w1h_1, w1x_1, b1_1, w2h_1, w2x_1, b2_1 = q1_params
    w0_2, b0_2, w1h_2, w1x_2, b1_2, w2h_2, w2x_2, b2_2 = q2_params
    # wide x-projection (exactly 2*H1 + 2*H2 = 1024 lanes): bf16 storage
    wx = jnp.concatenate([w0_1, w0_2, w1x_1, w1x_2],
                         axis=1).astype(jnp.bfloat16)
    bx = jnp.concatenate([b0_1, b0_2, b1_1, b1_2], axis=1)   # f32
    w1h1 = w1h_1.astype(jnp.bfloat16)
    w1h2 = w1h_2.astype(jnp.bfloat16)
    # final layer stays f32 (VPU epilogue)
    w2h_rows = jnp.concatenate([w2h_1.T, w2h_2.T], axis=0)   # (2, H2)
    w2x_rows = jnp.concatenate([w2x_1.T, w2x_2.T], axis=0)   # (2, in_dim)
    b2 = jnp.concatenate([b2_1, b2_2], axis=1)               # (1, 2)
    return (wx, bx, w1h1, w1h2, w2h_rows, w2x_rows, b2)


# Pure-JAX references for sanity checks.
def _q_bf16(t):
    return t.astype(jnp.bfloat16).astype(jnp.float32)


def _mlp_q_ref(x, params, quantized=False):
    """quantized=True mirrors the kernel's bf16 weight/activation storage."""
    w0, b0, w1h, w1x, b1, w2h, w2x, b2 = params
    qf = _q_bf16 if quantized else (lambda t: t)
    xq = qf(x)
    h1 = jnp.maximum(xq @ qf(w0) + b0, 0.0)
    h2 = jnp.maximum(qf(h1) @ qf(w1h) + xq @ qf(w1x) + b1, 0.0)
    return h2 @ w2h + x @ w2x + b2        # final layer in f32 (as in kernel)


if __name__ == "__main__":
    key = jax.random.PRNGKey(0)
    k_s, k_a, k_q1, k_q2 = jax.random.split(key, 4)

    batch = 8
    state_dim = 12
    action_dim = 4
    hidden = (256, 256)
    in_dim = state_dim + action_dim

    state = jax.random.normal(k_s, (batch, state_dim), jnp.float32)
    action = jax.random.normal(k_a, (batch, action_dim), jnp.float32)

    q1_params = make_q_params(k_q1, in_dim, hidden)
    q2_params = make_q_params(k_q2, in_dim, hidden)
    packed = pack_critic_params(q1_params, q2_params)

    # --- small-batch (gridless) path ---
    q1, q2 = critic_forward_pallas(state, action, packed, hidden)
    jax.block_until_ready((q1, q2))

    sa = jnp.concatenate([state, action], axis=1)
    assert q1.shape == (batch, 1) and q2.shape == (batch, 1)
    # tight check vs the bf16-quantized reference (same math as the kernel)
    assert jnp.allclose(q1, _mlp_q_ref(sa, q1_params, quantized=True),
                        atol=5e-3, rtol=5e-3)
    assert jnp.allclose(q2, _mlp_q_ref(sa, q2_params, quantized=True),
                        atol=5e-3, rtol=5e-3)
    # loose check vs the full-precision reference
    assert jnp.allclose(q1, _mlp_q_ref(sa, q1_params), atol=5e-2, rtol=5e-2)
    assert jnp.allclose(q2, _mlp_q_ref(sa, q2_params), atol=5e-2, rtol=5e-2)

    # --- large-batch (batch-gridded) path; B not divisible by block_b
    #     exercises the pad+slice handling ---
    B_big = 1000
    kb_s, kb_a = jax.random.split(jax.random.PRNGKey(1))
    state_b = jax.random.normal(kb_s, (B_big, state_dim), jnp.float32)
    action_b = jax.random.normal(kb_a, (B_big, action_dim), jnp.float32)
    q1b, q2b = critic_forward_pallas(state_b, action_b, packed, hidden,
                                     block_b=256)
    jax.block_until_ready((q1b, q2b))
    sab = jnp.concatenate([state_b, action_b], axis=1)
    assert q1b.shape == (B_big, 1) and q2b.shape == (B_big, 1)
    assert jnp.allclose(q1b, _mlp_q_ref(sab, q1_params, quantized=True),
                        atol=5e-3, rtol=5e-3)
    assert jnp.allclose(q2b, _mlp_q_ref(sab, q2_params, quantized=True),
                        atol=5e-3, rtol=5e-3)

    print("KERNEL_OK")
</pallas_src>

<mosaic_0001>
module attributes {stable_mosaic.version = 11 : i64} {
  func.func @_critic_kernel(%arg0: memref<8x16xf32, #tpu.memory_space<vmem>>, %arg1: memref<16x1024xbf16, #tpu.memory_space<vmem>>, %arg2: memref<1x1024xf32, #tpu.memory_space<vmem>>, %arg3: memref<256x256xbf16, #tpu.memory_space<vmem>>, %arg4: memref<256x256xbf16, #tpu.memory_space<vmem>>, %arg5: memref<2x256xf32, #tpu.memory_space<vmem>>, %arg6: memref<2x16xf32, #tpu.memory_space<vmem>>, %arg7: memref<1x2xf32, #tpu.memory_space<vmem>>, %arg8: memref<8x2xf32, #tpu.memory_space<vmem>>) attributes {dimension_semantics = [], scalar_prefetch = 0 : i64, scratch_operands = 0 : i64, tpu.core_type = #tpu.core_type<tc>} {
    %c0 = arith.constant 0 : index
    %c0_0 = arith.constant 0 : index
    %0 = vector.load %arg0[%c0, %c0_0] : memref<8x16xf32, #tpu.memory_space<vmem>>, vector<8x16xf32>
    %1 = arith.truncf %0 : vector<8x16xf32> to vector<8x16xbf16>
    %c0_1 = arith.constant 0 : index
    %c0_2 = arith.constant 0 : index
    %2 = vector.load %arg1[%c0_1, %c0_2] : memref<16x1024xbf16, #tpu.memory_space<vmem>>, vector<16x1024xbf16>
    %cst = arith.constant dense<0.000000e+00> : vector<8x1024xf32>
    %3 = tpu.matmul %1, %2, %cst {dimension_numbers = #tpu.dot_dimension_numbers<[1], [0], [0], [1], [0, 0, 1, 1], [], []>} : vector<8x16xbf16>, vector<16x1024xbf16>, vector<8x1024xf32> -> vector<8x1024xf32>
    %c0_3 = arith.constant 0 : index
    %c0_4 = arith.constant 0 : index
    %4 = vector.load %arg2[%c0_3, %c0_4] : memref<1x1024xf32, #tpu.memory_space<vmem>>, vector<1x1024xf32>
    %5 = vector.broadcast %4 : vector<1x1024xf32> to vector<8x1024xf32>
    %6 = arith.addf %3, %5 : vector<8x1024xf32>
    %7 = vector.extract_strided_slice %6 {offsets = [0, 0], sizes = [8, 256], strides = [1, 1]} : vector<8x1024xf32> to vector<8x256xf32>
    %cst_5 = arith.constant 0.000000e+00 : f32
    %8 = vector.broadcast %cst_5 : f32 to vector<8x256xf32>
    %9 = arith.maximumf %7, %8 : vector<8x256xf32>
    %10 = vector.extract_strided_slice %6 {offsets = [0, 256], sizes = [8, 256], strides = [1, 1]} : vector<8x1024xf32> to vector<8x256xf32>
    %cst_6 = arith.constant 0.000000e+00 : f32
    %11 = vector.broadcast %cst_6 : f32 to vector<8x256xf32>
    %12 = arith.maximumf %10, %11 : vector<8x256xf32>
    %13 = arith.truncf %9 : vector<8x256xf32> to vector<8x256xbf16>
    %c0_7 = arith.constant 0 : index
    %c0_8 = arith.constant 0 : index
    %14 = vector.load %arg3[%c0_7, %c0_8] : memref<256x256xbf16, #tpu.memory_space<vmem>>, vector<256x256xbf16>
    %cst_9 = arith.constant dense<0.000000e+00> : vector<8x256xf32>
    %15 = tpu.matmul %13, %14, %cst_9 {dimension_numbers = #tpu.dot_dimension_numbers<[1], [0], [0], [1], [0, 0, 1, 1], [], []>} : vector<8x256xbf16>, vector<256x256xbf16>, vector<8x256xf32> -> vector<8x256xf32>
    %16 = vector.extract_strided_slice %6 {offsets = [0, 512], sizes = [8, 256], strides = [1, 1]} : vector<8x1024xf32> to vector<8x256xf32>
    %17 = arith.addf %15, %16 : vector<8x256xf32>
    %cst_10 = arith.constant 0.000000e+00 : f32
    %18 = vector.broadcast %cst_10 : f32 to vector<8x256xf32>
    %19 = arith.maximumf %17, %18 : vector<8x256xf32>
    %20 = arith.truncf %12 : vector<8x256xf32> to vector<8x256xbf16>
    %c0_11 = arith.constant 0 : index
    %c0_12 = arith.constant 0 : index
    %21 = vector.load %arg4[%c0_11, %c0_12] : memref<256x256xbf16, #tpu.memory_space<vmem>>, vector<256x256xbf16>
    %cst_13 = arith.constant dense<0.000000e+00> : vector<8x256xf32>
    %22 = tpu.matmul %20, %21, %cst_13 {dimension_numbers = #tpu.dot_dimension_numbers<[1], [0], [0], [1], [0, 0, 1, 1], [], []>} : vector<8x256xbf16>, vector<256x256xbf16>, vector<8x256xf32> -> vector<8x256xf32>
    %23 = vector.extract_strided_slice %6 {offsets = [0, 768], sizes = [8, 256], strides = [1, 1]} : vector<8x1024xf32> to vector<8x256xf32>
    %24 = arith.addf %22, %23 : vector<8x256xf32>
    %cst_14 = arith.constant 0.000000e+00 : f32
    %25 = vector.broadcast %cst_14 : f32 to vector<8x256xf32>
    %26 = arith.maximumf %24, %25 : vector<8x256xf32>
    %c0_15 = arith.constant 0 : index
    %c0_16 = arith.constant 0 : index
    %27 = vector.load %arg5[%c0_15, %c0_16] : memref<2x256xf32, #tpu.memory_space<vmem>>, vector<2x256xf32>
    %c0_17 = arith.constant 0 : index
    %c0_18 = arith.constant 0 : index
    %28 = vector.load %arg6[%c0_17, %c0_18] : memref<2x16xf32, #tpu.memory_space<vmem>>, vector<2x16xf32>
    %29 = vector.extract_strided_slice %27 {offsets = [0, 0], sizes = [1, 256], strides = [1, 1]} : vector<2x256xf32> to vector<1x256xf32>
    %30 = vector.broadcast %29 : vector<1x256xf32> to vector<8x256xf32>
    %31 = arith.mulf %19, %30 : vector<8x256xf32>
    %cst_19 = arith.constant dense<0.000000e+00> : vector<8xf32>
    %32 = vector.multi_reduction <add>, %31, %cst_19 [1] : vector<8x256xf32> to vector<8xf32>
    %33 = vector.shape_cast %32 : vector<8xf32> to vector<8x1xf32>
    %34 = vector.extract_strided_slice %28 {offsets = [0, 0], sizes = [1, 16], strides = [1, 1]} : vector<2x16xf32> to vector<1x16xf32>
    %35 = vector.broadcast %34 : vector<1x16xf32> to vector<8x16xf32>
    %36 = arith.mulf %0, %35 : vector<8x16xf32>
    %cst_20 = arith.constant dense<0.000000e+00> : vector<8xf32>
    %37 = vector.multi_reduction <add>, %36, %cst_20 [1] : vector<8x16xf32> to vector<8xf32>
    %38 = vector.shape_cast %37 : vector<8xf32> to vector<8x1xf32>
    %39 = arith.addf %33, %38 : vector<8x1xf32>
    %40 = vector.extract_strided_slice %27 {offsets = [1, 0], sizes = [1, 256], strides = [1, 1]} : vector<2x256xf32> to vector<1x256xf32>
    %41 = vector.broadcast %40 : vector<1x256xf32> to vector<8x256xf32>
    %42 = arith.mulf %26, %41 : vector<8x256xf32>
    %cst_21 = arith.constant dense<0.000000e+00> : vector<8xf32>
    %43 = vector.multi_reduction <add>, %42, %cst_21 [1] : vector<8x256xf32> to vector<8xf32>
    %44 = vector.shape_cast %43 : vector<8xf32> to vector<8x1xf32>
    %45 = vector.extract_strided_slice %28 {offsets = [1, 0], sizes = [1, 16], strides = [1, 1]} : vector<2x16xf32> to vector<1x16xf32>
    %46 = vector.broadcast %45 : vector<1x16xf32> to vector<8x16xf32>
    %47 = arith.mulf %0, %46 : vector<8x16xf32>
    %cst_22 = arith.constant dense<0.000000e+00> : vector<8xf32>
    %48 = vector.multi_reduction <add>, %47, %cst_22 [1] : vector<8x16xf32> to vector<8xf32>
    %49 = vector.shape_cast %48 : vector<8xf32> to vector<8x1xf32>
    %50 = arith.addf %44, %49 : vector<8x1xf32>
    %51 = tpu.iota {dimensions = array<i32: 1>} : vector<8x2xi32>
    %c0_i32 = arith.constant 0 : i32
    %52 = vector.broadcast %c0_i32 : i32 to vector<8x2xi32>
    %53 = arith.cmpi eq, %51, %52 : vector<8x2xi32>
    %54 = vector.shape_cast %39 : vector<8x1xf32> to vector<8x1xf32>
    %55 = vector.broadcast %54 : vector<8x1xf32> to vector<8x2xf32>
    %56 = vector.shape_cast %50 : vector<8x1xf32> to vector<8x1xf32>
    %57 = vector.broadcast %56 : vector<8x1xf32> to vector<8x2xf32>
    %58 = arith.select %53, %55, %57 : vector<8x2xi1>, vector<8x2xf32>
    %c0_23 = arith.constant 0 : index
    %c0_24 = arith.constant 0 : index
    %59 = vector.load %arg7[%c0_23, %c0_24] : memref<1x2xf32, #tpu.memory_space<vmem>>, vector<1x2xf32>
    %60 = vector.broadcast %59 : vector<1x2xf32> to vector<8x2xf32>
    %61 = arith.addf %58, %60 : vector<8x2xf32>
    %c0_25 = arith.constant 0 : index
    %c0_26 = arith.constant 0 : index
    %62 = vector.load %arg8[%c0_25, %c0_26] : memref<8x2xf32, #tpu.memory_space<vmem>>, vector<8x2xf32>
    tpu.vector_store %arg8[%c0_25, %c0_26], %61 {strides = array<i32>} : memref<8x2xf32, #tpu.memory_space<vmem>>, vector<8x2xf32>,
    return
  }
}

</mosaic_0001>

<llo_original>
// kernel: tpu_custom_call.1
$region0: #{tpu_custom_call.1}
  #allocation0 [shape = 'u32[]', space=smem, size = 0x4, offset = 0x4, fixed_abs, tag = 'smem constant byte address 0x4 - core index']
  #allocation1 [shape = 'u32[72,128]{1,0:T(1,128)}', space=vmem, size = 0x9000, scoped, tag = 'internal scratch']
  %s0 = inlined_call_operand.hbm [shape: f32[8,16], index: 0, kind: input, shape index: {}]
  %s1 = inlined_call_operand.hbm [shape: bf16[16,1024], index: 1, kind: input, shape index: {}]
  %s2 = inlined_call_operand.hbm [shape: f32[1,1024], index: 2, kind: input, shape index: {}]
  %s3 = inlined_call_operand.hbm [shape: bf16[256,256], index: 3, kind: input, shape index: {}]
  %s4 = inlined_call_operand.hbm [shape: bf16[256,256], index: 4, kind: input, shape index: {}]
  %s5 = inlined_call_operand.vmem [shape: f32[2,256], index: 5, kind: input, shape index: {}]
  %s6 = inlined_call_operand.hbm [shape: f32[2,16], index: 6, kind: input, shape index: {}]
  %s7 = inlined_call_operand.vmem [shape: f32[1,2], index: 7, kind: input, shape index: {}]
  %s8 = inlined_call_operand.vmem [shape: f32[8,2], index: 8, kind: output, shape index: {}]
  %s9 = sld [smem:[#allocation0]]
  $region66: #{tpu_custom_call.1} parent=0
    _
  %s11 = ssub.s32 1, %s9
  %s12 = scalar_select 0, %s11, %s9
  $region1: #{tpu_custom_call.1} parent=0
    #allocation2 [shape = 'u8[4096]{0}', space=vmem, size = 0x1000, scoped, tag = 'input window, operand 0, single buffered']
    #allocation3 [shape = 's32[1]{0}', space=sflag, size = 0x4, scoped, tag = 'scoped memory for tpu_custom_call.1']
    #allocation4 [shape = 'u8[32768]{0}', space=vmem, size = 0x8000, scoped, tag = 'input window, operand 1, single buffered']
    #allocation5 [shape = 's32[1]{0}', space=sflag, size = 0x4, scoped, tag = 'scoped memory for tpu_custom_call.1']
    #allocation6 [shape = 'u8[4096]{0}', space=vmem, size = 0x1000, scoped, tag = 'input window, operand 2, single buffered']
    #allocation7 [shape = 'u8[131072]{0}', space=vmem, size = 0x20000, scoped, tag = 'input window, operand 3, single buffered']
    #allocation8 [shape = 's32[1]{0}', space=sflag, size = 0x4, scoped, tag = 'scoped memory for tpu_custom_call.1']
    #allocation9 [shape = 'u8[131072]{0}', space=vmem, size = 0x20000, scoped, tag = 'input window, operand 4, single buffered']
    #allocation10 [shape = 'u8[1024]{0}', space=vmem, size = 0x400, scoped, tag = 'input window, operand 6, single buffered']
    #allocation11 [shape = 's32[1]{0}', space=sflag, size = 0x4, scoped, tag = 'scoped memory for tpu_custom_call.1']
    %13 = vsyncpa [#allocation3], 0
    %14 = vsyncpa [#allocation5], 0
    %15 = vsyncpa [#allocation8], 0
    %16 = vsyncpa [#allocation11], 0
    // Predicated region
    $region2: #{tpu_custom_call.1} parent=1 // pred_check
      _
    $region3: #{tpu_custom_call.1} parent=1 // pred_check_branch
      %18 = sbr.rel (0) target = $region5
    $region4: #{tpu_custom_call.1} parent=1 // pred_region
      %20 = vsyncadd [#allocation3], 0
      %s22 = sshll.u32 %s0, 4
      %s23 = int_to_ptr.hbm [resolvable:$true] %s22
      %s24 = sshll.u32 [#allocation2], 4
      %s25 = int_to_ptr.vmem [resolvable:$true] %s24
      %27 = dma.hbm_to_vmem [thread:$0]  %s23, 128, %s25, [#allocation3]
    $region5: #{tpu_custom_call.1} parent=1 // pred_fallthru
      _
    // Predicated region
    $region6: #{tpu_custom_call.1} parent=1 // pred_check
      _
    $region7: #{tpu_custom_call.1} parent=1 // pred_check_branch
      %29 = sbr.rel (0) target = $region9
    $region8: #{tpu_custom_call.1} parent=1 // pred_region
      %31 = vsyncadd [#allocation5], 0
      %s32 = sshll.u32 %s1, 4
      %s33 = int_to_ptr.hbm [resolvable:$true] %s32
      %s34 = sshll.u32 [#allocation4], 4
      %s35 = int_to_ptr.vmem [resolvable:$true] %s34
      %40 = dma.hbm_to_vmem [thread:$0]  %s33, 1024, %s35, [#allocation5], 512, 512, 32
    $region9: #{tpu_custom_call.1} parent=1 // pred_fallthru
      _
    // Predicated region
    $region10: #{tpu_custom_call.1} parent=1 // pred_check
      _
    $region11: #{tpu_custom_call.1} parent=1 // pred_check_branch
      %42 = sbr.rel (0) target = $region13
    $region12: #{tpu_custom_call.1} parent=1 // pred_region
      %44 = vsyncadd [#allocation5], 0
      %s46 = sshll.u32 %s2, 4
      %s47 = int_to_ptr.hbm [resolvable:$true] %s46
      %s48 = sshll.u32 [#allocation6], 4
      %s49 = int_to_ptr.vmem [resolvable:$true] %s48
      %51 = dma.hbm_to_vmem [thread:$0]  %s47, 128, %s49, [#allocation5]
    $region13: #{tpu_custom_call.1} parent=1 // pred_fallthru
      _
    // Predicated region
    $region14: #{tpu_custom_call.1} parent=1 // pred_check
      _
    $region15: #{tpu_custom_call.1} parent=1 // pred_check_branch
      %53 = sbr.rel (0) target = $region17
    $region16: #{tpu_custom_call.1} parent=1 // pred_region
      %55 = vsyncadd [#allocation8], 0
      %s56 = sshll.u32 %s3, 4
      %s57 = int_to_ptr.hbm [resolvable:$true] %s56
      %s58 = sshll.u32 [#allocation7], 4
      %s59 = int_to_ptr.vmem [resolvable:$true] %s58
      %64 = dma.hbm_to_vmem [thread:$0]  %s57, 4096, %s59, [#allocation8], 128, 128, 8
    $region17: #{tpu_custom_call.1} parent=1 // pred_fallthru
      _
    // Predicated region
    $region18: #{tpu_custom_call.1} parent=1 // pred_check
      _
    $region19: #{tpu_custom_call.1} parent=1 // pred_check_branch
      %66 = sbr.rel (0) target = $region21
    $region20: #{tpu_custom_call.1} parent=1 // pred_region
      %68 = vsyncadd [#allocation8], 0
      %s69 = sshll.u32 %s4, 4
      %s70 = int_to_ptr.hbm [resolvable:$true] %s69
      %s71 = sshll.u32 [#allocation9], 4
      %s72 = int_to_ptr.vmem [resolvable:$true] %s71
      %77 = dma.hbm_to_vmem [thread:$0]  %s70, 4096, %s72, [#allocation8], 128, 128, 8
    $region21: #{tpu_custom_call.1} parent=1 // pred_fallthru
      _
    // Predicated region
    $region22: #{tpu_custom_call.1} parent=1 // pred_check
      _
    $region23: #{tpu_custom_call.1} parent=1 // pred_check_branch
      %79 = sbr.rel (0) target = $region25
    $region24: #{tpu_custom_call.1} parent=1 // pred_region
      _
    $region25: #{tpu_custom_call.1} parent=1 // pred_fallthru
      _
    // Predicated region
    $region26: #{tpu_custom_call.1} parent=1 // pred_check
      _
    $region27: #{tpu_custom_call.1} parent=1 // pred_check_branch
      %81 = sbr.rel (0) target = $region29
    $region28: #{tpu_custom_call.1} parent=1 // pred_region
      %83 = vsyncadd [#allocation11], 0
      %s85 = sshll.u32 %s6, 4
      %s86 = int_to_ptr.hbm [resolvable:$true] %s85
      %s87 = sshll.u32 [#allocation10], 4
      %s88 = int_to_ptr.vmem [resolvable:$true] %s87
      %90 = dma.hbm_to_vmem [thread:$0]  %s86, 32, %s88, [#allocation11]
    $region29: #{tpu_custom_call.1} parent=1 // pred_fallthru
      _
    // Predicated region
    $region30: #{tpu_custom_call.1} parent=1 // pred_check
      _
    $region31: #{tpu_custom_call.1} parent=1 // pred_check_branch
      %92 = sbr.rel (0) target = $region33
    $region32: #{tpu_custom_call.1} parent=1 // pred_region
      _
    $region33: #{tpu_custom_call.1} parent=1 // pred_fallthru
      _
    // Predicated region
    $region34: #{tpu_custom_call.1} parent=1 // pred_check
      _
    $region35: #{tpu_custom_call.1} parent=1 // pred_check_branch
      %94 = sbr.rel (0) target = $region37
    $region36: #{tpu_custom_call.1} parent=1 // pred_region
      %96 = dma.done [#allocation3], 128
    $region37: #{tpu_custom_call.1} parent=1 // pred_fallthru
      _
    // Predicated region
    $region38: #{tpu_custom_call.1} parent=1 // pred_check
      _
    $region39: #{tpu_custom_call.1} parent=1 // pred_check_branch
      %98 = sbr.rel (0) target = $region41
    $region40: #{tpu_custom_call.1} parent=1 // pred_region
      %100 = dma.done [#allocation5], 1024
    $region41: #{tpu_custom_call.1} parent=1 // pred_fallthru
      _
    // Predicated region
    $region42: #{tpu_custom_call.1} parent=1 // pred_check
      _
    $region43: #{tpu_custom_call.1} parent=1 // pred_check_branch
      %102 = sbr.rel (0) target = $region45
    $region44: #{tpu_custom_call.1} parent=1 // pred_region
      %104 = dma.done [#allocation5], 128
    $region45: #{tpu_custom_call.1} parent=1 // pred_fallthru
      _
    // Predicated region
    $region46: #{tpu_custom_call.1} parent=1 // pred_check
      _
    $region47: #{tpu_custom_call.1} parent=1 // pred_check_branch
      %106 = sbr.rel (0) target = $region49
    $region48: #{tpu_custom_call.1} parent=1 // pred_region
      %108 = dma.done [#allocation8], 4096
    $region49: #{tpu_custom_call.1} parent=1 // pred_fallthru
      _
    // Predicated region
    $region50: #{tpu_custom_call.1} parent=1 // pred_check
      _
    $region51: #{tpu_custom_call.1} parent=1 // pred_check_branch
      %110 = sbr.rel (0) target = $region53
    $region52: #{tpu_custom_call.1} parent=1 // pred_region
      %112 = dma.done [#allocation8], 4096
    $region53: #{tpu_custom_call.1} parent=1 // pred_fallthru
      _
    // Predicated region
    $region54: #{tpu_custom_call.1} parent=1 // pred_check
      _
    $region55: #{tpu_custom_call.1} parent=1 // pred_check_branch
      %114 = sbr.rel (0) target = $region57
    $region56: #{tpu_custom_call.1} parent=1 // pred_region
      %116 = dma.done [#allocation11], 32
    $region57: #{tpu_custom_call.1} parent=1 // pred_fallthru
      _
    %v118 = vld [vmem:[#allocation2] sm:$0xff]
    %v119 = vpack.c.bf16 %v118, %v118
    %v120 = vld [vmem:[#allocation4] sm:$0xff]
    %v121 = vld [vmem:[#allocation4 + $0x8] sm:$0xff]
    %v122 = vld [vmem:[#allocation4 + $0x10] sm:$0xff]
    %v123 = vld [vmem:[#allocation4 + $0x18] sm:$0xff]
    %v124 = vld [vmem:[#allocation4 + $0x20] sm:$0xff]
    %v125 = vld [vmem:[#allocation4 + $0x28] sm:$0xff]
    %v126 = vld [vmem:[#allocation4 + $0x30] sm:$0xff]
    %v127 = vld [vmem:[#allocation4 + $0x38] sm:$0xff]
    %v128 = vld [vmem:[#allocation6] sm:$0xff]
    %v130 = vperm.slane %v128, 0
    %v131 = vperm.slane %v128, 1
    %v132 = vperm.slane %v128, 2
    %v133 = vperm.slane %v128, 3
    %v134 = vperm.slane %v128, 4
    %v135 = vperm.slane %v128, 5
    %v136 = vperm.slane %v128, 6
    %v137 = vperm.slane %v128, 7
    %v154 = vunpack.c.l.b16 %v120
    %v155 = vunpack.c.h.b16 %v120
    %v156 = vunpack.c.l.b16 %v121
    %v157 = vunpack.c.h.b16 %v121
    %v158 = vunpack.c.l.b16 %v122
    %v159 = vunpack.c.h.b16 %v122
    %v160 = vunpack.c.l.b16 %v123
    %v161 = vunpack.c.h.b16 %v123
    %v162 = vunpack.c.l.b16 %v124
    %v163 = vunpack.c.h.b16 %v124
    %v164 = vunpack.c.l.b16 %v125
    %v165 = vunpack.c.h.b16 %v125
    %v166 = vunpack.c.l.b16 %v126
    %v167 = vunpack.c.h.b16 %v126
    %v168 = vunpack.c.l.b16 %v127
    %v169 = vunpack.c.h.b16 %v127
    %v170 = vpack.c.b16 %v162, %v154
    %v171 = vpack.c.b16 %v163, %v155
    %v172 = vpack.c.b16 %v164, %v156
    %v173 = vpack.c.b16 %v165, %v157
    %v174 = vpack.c.b16 %v166, %v158
    %v175 = vpack.c.b16 %v167, %v159
    %v176 = vpack.c.b16 %v168, %v160
    %v177 = vpack.c.b16 %v169, %v161
    %vm186 = vcmask 130048
    %v188 = vsel %vm186, %v119, 0
    %190 = vmatpush.bf16.msra.mxu0 0
    %191 = vmatpush.bf16.msra.mxu0 0
    %192 = vmatpush.bf16.msra.mxu0 0
    %193 = vmatpush.bf16.msra.mxu0 0
    %194 = vmatpush.bf16.msra.mxu0 0
    %195 = vmatpush.bf16.msra.mxu0 0
    %196 = vmatpush.bf16.msra.mxu0 0
    %197 = vmatpush.bf16.msra.mxu0 %v170
    %198 = vmatmul.bf16.gmra.mxu0 %v188
    %v199 = vpop.f32.mrf.mxu0
    %v200 = vadd.f32 %v130, %v199
    %v201 = vpop.f32.mrf.mxu0
    %202 = vdwg.mxu0
    %203 = vmatpush.bf16.msra.mxu0 0
    %204 = vmatpush.bf16.msra.mxu0 0
    %205 = vmatpush.bf16.msra.mxu0 0
    %206 = vmatpush.bf16.msra.mxu0 0
    %207 = vmatpush.bf16.msra.mxu0 0
    %208 = vmatpush.bf16.msra.mxu0 0
    %209 = vmatpush.bf16.msra.mxu0 0
    %210 = vmatpush.bf16.msra.mxu0 %v171
    %211 = vmatmul.bf16.gmra.mxu0 %v188
    %v212 = vpop.f32.mrf.mxu0
    %v213 = vadd.f32 %v131, %v212
    %v214 = vpop.f32.mrf.mxu0
    %215 = vdwg.mxu0
    %216 = vmatpush.bf16.msra.mxu0 0
    %217 = vmatpush.bf16.msra.mxu0 0
    %218 = vmatpush.bf16.msra.mxu0 0
    %219 = vmatpush.bf16.msra.mxu0 0
    %220 = vmatpush.bf16.msra.mxu0 0
    %221 = vmatpush.bf16.msra.mxu0 0
    %222 = vmatpush.bf16.msra.mxu0 0
    %223 = vmatpush.bf16.msra.mxu0 %v172
    %224 = vmatmul.bf16.gmra.mxu0 %v188
    %v225 = vpop.f32.mrf.mxu0
    %v226 = vadd.f32 %v132, %v225
    %v227 = vpop.f32.mrf.mxu0
    %228 = vdwg.mxu0
    %229 = vmatpush.bf16.msra.mxu0 0
    %230 = vmatpush.bf16.msra.mxu0 0
    %231 = vmatpush.bf16.msra.mxu0 0
    %232 = vmatpush.bf16.msra.mxu0 0
    %233 = vmatpush.bf16.msra.mxu0 0
    %234 = vmatpush.bf16.msra.mxu0 0
    %235 = vmatpush.bf16.msra.mxu0 0
    %236 = vmatpush.bf16.msra.mxu0 %v173
    %237 = vmatmul.bf16.gmra.mxu0 %v188
    %v238 = vpop.f32.mrf.mxu0
    %v239 = vadd.f32 %v133, %v238
    %v240 = vpop.f32.mrf.mxu0
    %241 = vdwg.mxu0
    %242 = vmatpush.bf16.msra.mxu0 0
    %243 = vmatpush.bf16.msra.mxu0 0
    %244 = vmatpush.bf16.msra.mxu0 0
    %245 = vmatpush.bf16.msra.mxu0 0
    %246 = vmatpush.bf16.msra.mxu0 0
    %247 = vmatpush.bf16.msra.mxu0 0
    %248 = vmatpush.bf16.msra.mxu0 0
    %249 = vmatpush.bf16.msra.mxu0 %v174
    %250 = vmatmul.bf16.gmra.mxu0 %v188
    %v251 = vpop.f32.mrf.mxu0
    %v252 = vadd.f32 %v134, %v251
    %v253 = vpop.f32.mrf.mxu0
    %254 = vdwg.mxu0
    %255 = vmatpush.bf16.msra.mxu0 0
    %256 = vmatpush.bf16.msra.mxu0 0
    %257 = vmatpush.bf16.msra.mxu0 0
    %258 = vmatpush.bf16.msra.mxu0 0
    %259 = vmatpush.bf16.msra.mxu0 0
    %260 = vmatpush.bf16.msra.mxu0 0
    %261 = vmatpush.bf16.msra.mxu0 0
    %262 = vmatpush.bf16.msra.mxu0 %v175
    %263 = vmatmul.bf16.gmra.mxu0 %v188
    %v264 = vpop.f32.mrf.mxu0
    %v265 = vadd.f32 %v135, %v264
    %v266 = vpop.f32.mrf.mxu0
    %267 = vdwg.mxu0
    %268 = vmatpush.bf16.msra.mxu0 0
    %269 = vmatpush.bf16.msra.mxu0 0
    %270 = vmatpush.bf16.msra.mxu0 0
    %271 = vmatpush.bf16.msra.mxu0 0
    %272 = vmatpush.bf16.msra.mxu0 0
    %273 = vmatpush.bf16.msra.mxu0 0
    %274 = vmatpush.bf16.msra.mxu0 0
    %275 = vmatpush.bf16.msra.mxu0 %v176
    %276 = vmatmul.bf16.gmra.mxu0 %v188
    %v277 = vpop.f32.mrf.mxu0
    %v278 = vadd.f32 %v136, %v277
    %v279 = vpop.f32.mrf.mxu0
    %280 = vdwg.mxu0
    %281 = vmatpush.bf16.msra.mxu0 0
    %282 = vmatpush.bf16.msra.mxu0 0
    %283 = vmatpush.bf16.msra.mxu0 0
    %284 = vmatpush.bf16.msra.mxu0 0
    %285 = vmatpush.bf16.msra.mxu0 0
    %286 = vmatpush.bf16.msra.mxu0 0
    %287 = vmatpush.bf16.msra.mxu0 0
    %288 = vmatpush.bf16.msra.mxu0 %v177
    %289 = vmatmul.bf16.gmra.mxu0 %v188
    %v290 = vpop.f32.mrf.mxu0
    %v291 = vadd.f32 %v137, %v290
    %v292 = vpop.f32.mrf.mxu0
    %293 = vdwg.mxu0
    %v294 = vmax.f32 %v200, 0.0
    %v295 = vmax.f32 %v213, 0.0
    %v296 = vmax.f32 %v226, 0.0
    %v297 = vmax.f32 %v239, 0.0
    %v298 = vpack.c.bf16 %v294, %v294
    %v299 = vpack.c.bf16 %v295, %v295
    %v300 = vld [vmem:[#allocation7] sm:$0xff]
    %v301 = vld [vmem:[#allocation7 + $0x8] sm:$0xff]
    %v302 = vld [vmem:[#allocation7 + $0x10] sm:$0xff]
    %v303 = vld [vmem:[#allocation7 + $0x18] sm:$0xff]
    %v304 = vld [vmem:[#allocation7 + $0x20] sm:$0xff]
    %v305 = vld [vmem:[#allocation7 + $0x28] sm:$0xff]
    %v306 = vld [vmem:[#allocation7 + $0x30] sm:$0xff]
    %v307 = vld [vmem:[#allocation7 + $0x38] sm:$0xff]
    %v308 = vld [vmem:[#allocation7 + $0x40] sm:$0xff]
    %v309 = vld [vmem:[#allocation7 + $0x48] sm:$0xff]
    %v310 = vld [vmem:[#allocation7 + $0x50] sm:$0xff]
    %v311 = vld [vmem:[#allocation7 + $0x58] sm:$0xff]
    %v312 = vld [vmem:[#allocation7 + $0x60] sm:$0xff]
    %v313 = vld [vmem:[#allocation7 + $0x68] sm:$0xff]
    %v314 = vld [vmem:[#allocation7 + $0x70] sm:$0xff]
    %v315 = vld [vmem:[#allocation7 + $0x78] sm:$0xff]
    %v316 = vld [vmem:[#allocation7 + $0x80] sm:$0xff]
    %v317 = vld [vmem:[#allocation7 + $0x88] sm:$0xff]
    %v318 = vld [vmem:[#allocation7 + $0x90] sm:$0xff]
    %v319 = vld [vmem:[#allocation7 + $0x98] sm:$0xff]
    %v320 = vld [vmem:[#allocation7 + $0xa0] sm:$0xff]
    %v321 = vld [vmem:[#allocation7 + $0xa8] sm:$0xff]
    %v322 = vld [vmem:[#allocation7 + $0xb0] sm:$0xff]
    %v323 = vld [vmem:[#allocation7 + $0xb8] sm:$0xff]
    %v324 = vld [vmem:[#allocation7 + $0xc0] sm:$0xff]
    %v325 = vld [vmem:[#allocation7 + $0xc8] sm:$0xff]
    %v326 = vld [vmem:[#allocation7 + $0xd0] sm:$0xff]
    %v327 = vld [vmem:[#allocation7 + $0xd8] sm:$0xff]
    %v328 = vld [vmem:[#allocation7 + $0xe0] sm:$0xff]
    %v329 = vld [vmem:[#allocation7 + $0xe8] sm:$0xff]
    %v330 = vld [vmem:[#allocation7 + $0xf0] sm:$0xff]
    %v331 = vld [vmem:[#allocation7 + $0xf8] sm:$0xff]
    %v364 = vunpack.c.l.b16 %v300
    %v365 = vunpack.c.h.b16 %v300
    %v366 = vunpack.c.l.b16 %v301
    %v367 = vunpack.c.h.b16 %v301
    %v368 = vunpack.c.l.b16 %v302
    %v369 = vunpack.c.h.b16 %v302
    %v370 = vunpack.c.l.b16 %v303
    %v371 = vunpack.c.h.b16 %v303
    %v372 = vunpack.c.l.b16 %v304
    %v373 = vunpack.c.h.b16 %v304
    %v374 = vunpack.c.l.b16 %v305
    %v375 = vunpack.c.h.b16 %v305
    %v376 = vunpack.c.l.b16 %v306
    %v377 = vunpack.c.h.b16 %v306
    %v378 = vunpack.c.l.b16 %v307
    %v379 = vunpack.c.h.b16 %v307
    %v380 = vunpack.c.l.b16 %v308
    %v381 = vunpack.c.h.b16 %v308
    %v382 = vunpack.c.l.b16 %v309
    %v383 = vunpack.c.h.b16 %v309
    %v384 = vunpack.c.l.b16 %v310
    %v385 = vunpack.c.h.b16 %v310
    %v386 = vunpack.c.l.b16 %v311
    %v387 = vunpack.c.h.b16 %v311
    %v388 = vunpack.c.l.b16 %v312
    %v389 = vunpack.c.h.b16 %v312
    %v390 = vunpack.c.l.b16 %v313
    %v391 = vunpack.c.h.b16 %v313
    %v392 = vunpack.c.l.b16 %v314
    %v393 = vunpack.c.h.b16 %v314
    %v394 = vunpack.c.l.b16 %v315
    %v395 = vunpack.c.h.b16 %v315
    %v396 = vunpack.c.l.b16 %v316
    %v397 = vunpack.c.h.b16 %v316
    %v398 = vunpack.c.l.b16 %v317
    %v399 = vunpack.c.h.b16 %v317
    %v400 = vunpack.c.l.b16 %v318
    %v401 = vunpack.c.h.b16 %v318
    %v402 = vunpack.c.l.b16 %v319
    %v403 = vunpack.c.h.b16 %v319
    %v404 = vunpack.c.l.b16 %v320
    %v405 = vunpack.c.h.b16 %v320
    %v406 = vunpack.c.l.b16 %v321
    %v407 = vunpack.c.h.b16 %v321
    %v408 = vunpack.c.l.b16 %v322
    %v409 = vunpack.c.h.b16 %v322
    %v410 = vunpack.c.l.b16 %v323
    %v411 = vunpack.c.h.b16 %v323
    %v412 = vunpack.c.l.b16 %v324
    %v413 = vunpack.c.h.b16 %v324
    %v414 = vunpack.c.l.b16 %v325
    %v415 = vunpack.c.h.b16 %v325
    %v416 = vunpack.c.l.b16 %v326
    %v417 = vunpack.c.h.b16 %v326
    %v418 = vunpack.c.l.b16 %v327
    %v419 = vunpack.c.h.b16 %v327
    %v420 = vunpack.c.l.b16 %v328
    %v421 = vunpack.c.h.b16 %v328
    %v422 = vunpack.c.l.b16 %v329
    %v423 = vunpack.c.h.b16 %v329
    %v424 = vunpack.c.l.b16 %v330
    %v425 = vunpack.c.h.b16 %v330
    %v426 = vunpack.c.l.b16 %v331
    %v427 = vunpack.c.h.b16 %v331
    %v428 = vpack.c.b16 %v366, %v364
    %v429 = vpack.c.b16 %v367, %v365
    %v430 = vpack.c.b16 %v370, %v368
    %v431 = vpack.c.b16 %v371, %v369
    %v432 = vpack.c.b16 %v374, %v372
    %v433 = vpack.c.b16 %v375, %v373
    %v434 = vpack.c.b16 %v378, %v376
    %v435 = vpack.c.b16 %v379, %v377
    %v436 = vpack.c.b16 %v382, %v380
    %v437 = vpack.c.b16 %v383, %v381
    %v438 = vpack.c.b16 %v386, %v384
    %v439 = vpack.c.b16 %v387, %v385
    %v440 = vpack.c.b16 %v390, %v388
    %v441 = vpack.c.b16 %v391, %v389
    %v442 = vpack.c.b16 %v394, %v392
    %v443 = vpack.c.b16 %v395, %v393
    %v444 = vpack.c.b16 %v398, %v396
    %v445 = vpack.c.b16 %v399, %v397
    %v446 = vpack.c.b16 %v402, %v400
    %v447 = vpack.c.b16 %v403, %v401
    %v448 = vpack.c.b16 %v406, %v404
    %v449 = vpack.c.b16 %v407, %v405
    %v450 = vpack.c.b16 %v410, %v408
    %v451 = vpack.c.b16 %v411, %v409
    %v452 = vpack.c.b16 %v414, %v412
    %v453 = vpack.c.b16 %v415, %v413
    %v454 = vpack.c.b16 %v418, %v416
    %v455 = vpack.c.b16 %v419, %v417
    %v456 = vpack.c.b16 %v422, %v420
    %v457 = vpack.c.b16 %v423, %v421
    %v458 = vpack.c.b16 %v426, %v424
    %v459 = vpack.c.b16 %v427, %v425
    %492 = vmatpush.bf16.msra.mxu0 %v442
    %493 = vmatpush.bf16.msra.mxu0 %v440
    %494 = vmatpush.bf16.msra.mxu0 %v438
    %495 = vmatpush.bf16.msra.mxu0 %v436
    %496 = vmatpush.bf16.msra.mxu0 %v434
    %497 = vmatpush.bf16.msra.mxu0 %v432
    %498 = vmatpush.bf16.msra.mxu0 %v430
    %499 = vmatpush.bf16.msra.mxu0 %v428
    %500 = vmatmul.bf16.gmra.mxu0 %v298
    %v501 = vpop.f32.mrf.mxu0
    %v502 = vadd.f32 %v252, %v501
    %v503 = vpop.f32.mrf.mxu0
    %504 = vdwg.mxu0
    %505 = vmatpush.bf16.msra.mxu0 %v458
    %506 = vmatpush.bf16.msra.mxu0 %v456
    %507 = vmatpush.bf16.msra.mxu0 %v454
    %508 = vmatpush.bf16.msra.mxu0 %v452
    %509 = vmatpush.bf16.msra.mxu0 %v450
    %510 = vmatpush.bf16.msra.mxu0 %v448
    %511 = vmatpush.bf16.msra.mxu0 %v446
    %512 = vmatpush.bf16.msra.mxu0 %v444
    %513 = vmatmul.bf16.gmra.mxu0 %v299
    %v514 = vpop.f32.mrf.mxu0
    %v515 = vadd.f32 %v502, %v514
    %v516 = vpop.f32.mrf.mxu0
    %517 = vdwg.mxu0
    %518 = vmatpush.bf16.msra.mxu0 %v443
    %519 = vmatpush.bf16.msra.mxu0 %v441
    %520 = vmatpush.bf16.msra.mxu0 %v439
    %521 = vmatpush.bf16.msra.mxu0 %v437
    %522 = vmatpush.bf16.msra.mxu0 %v435
    %523 = vmatpush.bf16.msra.mxu0 %v433
    %524 = vmatpush.bf16.msra.mxu0 %v431
    %525 = vmatpush.bf16.msra.mxu0 %v429
    %526 = vmatmul.bf16.gmra.mxu0 %v298
    %v527 = vpop.f32.mrf.mxu0
    %v528 = vadd.f32 %v265, %v527
    %v529 = vpop.f32.mrf.mxu0
    %530 = vdwg.mxu0
    %531 = vmatpush.bf16.msra.mxu0 %v459
    %532 = vmatpush.bf16.msra.mxu0 %v457
    %533 = vmatpush.bf16.msra.mxu0 %v455
    %534 = vmatpush.bf16.msra.mxu0 %v453
    %535 = vmatpush.bf16.msra.mxu0 %v451
    %536 = vmatpush.bf16.msra.mxu0 %v449
    %537 = vmatpush.bf16.msra.mxu0 %v447
    %538 = vmatpush.bf16.msra.mxu0 %v445
    %539 = vmatmul.bf16.gmra.mxu0 %v299
    %v540 = vpop.f32.mrf.mxu0
    %v541 = vadd.f32 %v528, %v540
    %v542 = vpop.f32.mrf.mxu0
    %543 = vdwg.mxu0
    %v544 = vmax.f32 %v515, 0.0
    %v545 = vmax.f32 %v541, 0.0
    %v546 = vpack.c.bf16 %v296, %v296
    %v547 = vpack.c.bf16 %v297, %v297
    %v548 = vld [vmem:[#allocation9] sm:$0xff]
    %v549 = vld [vmem:[#allocation9 + $0x8] sm:$0xff]
    %v550 = vld [vmem:[#allocation9 + $0x10] sm:$0xff]
    %v551 = vld [vmem:[#allocation9 + $0x18] sm:$0xff]
    %v552 = vld [vmem:[#allocation9 + $0x20] sm:$0xff]
    %v553 = vld [vmem:[#allocation9 + $0x28] sm:$0xff]
    %v554 = vld [vmem:[#allocation9 + $0x30] sm:$0xff]
    %v555 = vld [vmem:[#allocation9 + $0x38] sm:$0xff]
    %v556 = vld [vmem:[#allocation9 + $0x40] sm:$0xff]
    %v557 = vld [vmem:[#allocation9 + $0x48] sm:$0xff]
    %v558 = vld [vmem:[#allocation9 + $0x50] sm:$0xff]
    %v559 = vld [vmem:[#allocation9 + $0x58] sm:$0xff]
    %v560 = vld [vmem:[#allocation9 + $0x60] sm:$0xff]
    %v561 = vld [vmem:[#allocation9 + $0x68] sm:$0xff]
    %v562 = vld [vmem:[#allocation9 + $0x70] sm:$0xff]
    %v563 = vld [vmem:[#allocation9 + $0x78] sm:$0xff]
    %v564 = vld [vmem:[#allocation9 + $0x80] sm:$0xff]
    %v565 = vld [vmem:[#allocation9 + $0x88] sm:$0xff]
    %v566 = vld [vmem:[#allocation9 + $0x90] sm:$0xff]
    %v567 = vld [vmem:[#allocation9 + $0x98] sm:$0xff]
    %v568 = vld [vmem:[#allocation9 + $0xa0] sm:$0xff]
    %v569 = vld [vmem:[#allocation9 + $0xa8] sm:$0xff]
    %v570 = vld [vmem:[#allocation9 + $0xb0] sm:$0xff]
    %v571 = vld [vmem:[#allocation9 + $0xb8] sm:$0xff]
    %v572 = vld [vmem:[#allocation9 + $0xc0] sm:$0xff]
    %v573 = vld [vmem:[#allocation9 + $0xc8] sm:$0xff]
    %v574 = vld [vmem:[#allocation9 + $0xd0] sm:$0xff]
    %v575 = vld [vmem:[#allocation9 + $0xd8] sm:$0xff]
    %v576 = vld [vmem:[#allocation9 + $0xe0] sm:$0xff]
    %v577 = vld [vmem:[#allocation9 + $0xe8] sm:$0xff]
    %v578 = vld [vmem:[#allocation9 + $0xf0] sm:$0xff]
    %v579 = vld [vmem:[#allocation9 + $0xf8] sm:$0xff]
    %v612 = vunpack.c.l.b16 %v548
    %v613 = vunpack.c.h.b16 %v548
    %v614 = vunpack.c.l.b16 %v549
    %v615 = vunpack.c.h.b16 %v549
    %v616 = vunpack.c.l.b16 %v550
    %v617 = vunpack.c.h.b16 %v550
    %v618 = vunpack.c.l.b16 %v551
    %v619 = vunpack.c.h.b16 %v551
    %v620 = vunpack.c.l.b16 %v552
    %v621 = vunpack.c.h.b16 %v552
    %v622 = vunpack.c.l.b16 %v553
    %v623 = vunpack.c.h.b16 %v553
    %v624 = vunpack.c.l.b16 %v554
    %v625 = vunpack.c.h.b16 %v554
    %v626 = vunpack.c.l.b16 %v555
    %v627 = vunpack.c.h.b16 %v555
    %v628 = vunpack.c.l.b16 %v556
    %v629 = vunpack.c.h.b16 %v556
    %v630 = vunpack.c.l.b16 %v557
    %v631 = vunpack.c.h.b16 %v557
    %v632 = vunpack.c.l.b16 %v558
    %v633 = vunpack.c.h.b16 %v558
    %v634 = vunpack.c.l.b16 %v559
    %v635 = vunpack.c.h.b16 %v559
    %v636 = vunpack.c.l.b16 %v560
    %v637 = vunpack.c.h.b16 %v560
    %v638 = vunpack.c.l.b16 %v561
    %v639 = vunpack.c.h.b16 %v561
    %v640 = vunpack.c.l.b16 %v562
    %v641 = vunpack.c.h.b16 %v562
    %v642 = vunpack.c.l.b16 %v563
    %v643 = vunpack.c.h.b16 %v563
    %v644 = vunpack.c.l.b16 %v564
    %v645 = vunpack.c.h.b16 %v564
    %v646 = vunpack.c.l.b16 %v565
    %v647 = vunpack.c.h.b16 %v565
    %v648 = vunpack.c.l.b16 %v566
    %v649 = vunpack.c.h.b16 %v566
    %v650 = vunpack.c.l.b16 %v567
    %v651 = vunpack.c.h.b16 %v567
    %v652 = vunpack.c.l.b16 %v568
    %v653 = vunpack.c.h.b16 %v568
    %v654 = vunpack.c.l.b16 %v569
    %v655 = vunpack.c.h.b16 %v569
    %v656 = vunpack.c.l.b16 %v570
    %v657 = vunpack.c.h.b16 %v570
    %v658 = vunpack.c.l.b16 %v571
    %v659 = vunpack.c.h.b16 %v571
    %v660 = vunpack.c.l.b16 %v572
    %v661 = vunpack.c.h.b16 %v572
    %v662 = vunpack.c.l.b16 %v573
    %v663 = vunpack.c.h.b16 %v573
    %v664 = vunpack.c.l.b16 %v574
    %v665 = vunpack.c.h.b16 %v574
    %v666 = vunpack.c.l.b16 %v575
    %v667 = vunpack.c.h.b16 %v575
    %v668 = vunpack.c.l.b16 %v576
    %v669 = vunpack.c.h.b16 %v576
    %v670 = vunpack.c.l.b16 %v577
    %v671 = vunpack.c.h.b16 %v577
    %v672 = vunpack.c.l.b16 %v578
    %v673 = vunpack.c.h.b16 %v578
    %v674 = vunpack.c.l.b16 %v579
    %v675 = vunpack.c.h.b16 %v579
    %v676 = vpack.c.b16 %v614, %v612
    %v677 = vpack.c.b16 %v615, %v613
    %v678 = vpack.c.b16 %v618, %v616
    %v679 = vpack.c.b16 %v619, %v617
    %v680 = vpack.c.b16 %v622, %v620
    %v681 = vpack.c.b16 %v623, %v621
    %v682 = vpack.c.b16 %v626, %v624
    %v683 = vpack.c.b16 %v627, %v625
    %v684 = vpack.c.b16 %v630, %v628
    %v685 = vpack.c.b16 %v631, %v629
    %v686 = vpack.c.b16 %v634, %v632
    %v687 = vpack.c.b16 %v635, %v633
    %v688 = vpack.c.b16 %v638, %v636
    %v689 = vpack.c.b16 %v639, %v637
    %v690 = vpack.c.b16 %v642, %v640
    %v691 = vpack.c.b16 %v643, %v641
    %v692 = vpack.c.b16 %v646, %v644
    %v693 = vpack.c.b16 %v647, %v645
    %v694 = vpack.c.b16 %v650, %v648
    %v695 = vpack.c.b16 %v651, %v649
    %v696 = vpack.c.b16 %v654, %v652
    %v697 = vpack.c.b16 %v655, %v653
    %v698 = vpack.c.b16 %v658, %v656
    %v699 = vpack.c.b16 %v659, %v657
    %v700 = vpack.c.b16 %v662, %v660
    %v701 = vpack.c.b16 %v663, %v661
    %v702 = vpack.c.b16 %v666, %v664
    %v703 = vpack.c.b16 %v667, %v665
    %v704 = vpack.c.b16 %v670, %v668
    %v705 = vpack.c.b16 %v671, %v669
    %v706 = vpack.c.b16 %v674, %v672
    %v707 = vpack.c.b16 %v675, %v673
    %740 = vmatpush.bf16.msra.mxu0 %v690
    %741 = vmatpush.bf16.msra.mxu0 %v688
    %742 = vmatpush.bf16.msra.mxu0 %v686
    %743 = vmatpush.bf16.msra.mxu0 %v684
    %744 = vmatpush.bf16.msra.mxu0 %v682
    %745 = vmatpush.bf16.msra.mxu0 %v680
    %746 = vmatpush.bf16.msra.mxu0 %v678
    %747 = vmatpush.bf16.msra.mxu0 %v676
    %748 = vmatmul.bf16.gmra.mxu0 %v546
    %v749 = vpop.f32.mrf.mxu0
    %v750 = vadd.f32 %v278, %v749
    %v751 = vpop.f32.mrf.mxu0
    %752 = vdwg.mxu0
    %753 = vmatpush.bf16.msra.mxu0 %v706
    %754 = vmatpush.bf16.msra.mxu0 %v704
    %755 = vmatpush.bf16.msra.mxu0 %v702
    %756 = vmatpush.bf16.msra.mxu0 %v700
    %757 = vmatpush.bf16.msra.mxu0 %v698
    %758 = vmatpush.bf16.msra.mxu0 %v696
    %759 = vmatpush.bf16.msra.mxu0 %v694
    %760 = vmatpush.bf16.msra.mxu0 %v692
    %761 = vmatmul.bf16.gmra.mxu0 %v547
    %v762 = vpop.f32.mrf.mxu0
    %v763 = vadd.f32 %v750, %v762
    %v764 = vpop.f32.mrf.mxu0
    %765 = vdwg.mxu0
    %766 = vmatpush.bf16.msra.mxu0 %v691
    %767 = vmatpush.bf16.msra.mxu0 %v689
    %768 = vmatpush.bf16.msra.mxu0 %v687
    %769 = vmatpush.bf16.msra.mxu0 %v685
    %770 = vmatpush.bf16.msra.mxu0 %v683
    %771 = vmatpush.bf16.msra.mxu0 %v681
    %772 = vmatpush.bf16.msra.mxu0 %v679
    %773 = vmatpush.bf16.msra.mxu0 %v677
    %774 = vmatmul.bf16.gmra.mxu0 %v546
    %v775 = vpop.f32.mrf.mxu0
    %v776 = vadd.f32 %v291, %v775
    %v777 = vpop.f32.mrf.mxu0
    %778 = vdwg.mxu0
    %779 = vmatpush.bf16.msra.mxu0 %v707
    %780 = vmatpush.bf16.msra.mxu0 %v705
    %781 = vmatpush.bf16.msra.mxu0 %v703
    %782 = vmatpush.bf16.msra.mxu0 %v701
    %783 = vmatpush.bf16.msra.mxu0 %v699
    %784 = vmatpush.bf16.msra.mxu0 %v697
    %785 = vmatpush.bf16.msra.mxu0 %v695
    %786 = vmatpush.bf16.msra.mxu0 %v693
    %787 = vmatmul.bf16.gmra.mxu0 %v547
    %v788 = vpop.f32.mrf.mxu0
    %v789 = vadd.f32 %v776, %v788
    %v790 = vpop.f32.mrf.mxu0
    %791 = vdwg.mxu0
    %v792 = vmax.f32 %v763, 0.0
    %v793 = vmax.f32 %v789, 0.0
    %v794 = vld [vmem:[%s5] sm:$0xf]
    %v795 = vld [vmem:[#allocation10] sm:$0x3]
    %v797 = vperm.slane %v794, 0
    %v798 = vperm.slane %v794, 2
    %v801 = vperm.slane %v797, 0
    %v802 = vperm.slane %v798, 0
    %v803 = vmul.f32 %v544, %v801
    %v804 = vmul.f32 %v545, %v802
    %v805 = vadd.f32 %v803, %v804
    %806 = vadd.xlane.f32.xlu0 %v805
    %v807 = vpop.xlane.xlu0 %806
    %v808 = vperm.slane %v795, 0
    %v809 = vmul.f32 %v118, %v808
    %v810 = vsel %vm186, %v809, 0.0
    %811 = vadd.xlane.f32.xlu0 %v810
    %v812 = vpop.xlane.xlu0 %811
    %v813 = vadd.f32 %v807, %v812
    %v814 = vperm.slane %v794, 1
    %v815 = vperm.slane %v794, 3
    %v818 = vperm.slane %v814, 1
    %v819 = vperm.slane %v815, 1
    %v820 = vmul.f32 %v792, %v818
    %v821 = vmul.f32 %v793, %v819
    %v822 = vadd.f32 %v820, %v821
    %823 = vadd.xlane.f32.xlu0 %v822
    %v824 = vpop.xlane.xlu0 %823
    %v825 = vperm.slane %v795, 1
    %v826 = vmul.f32 %v118, %v825
    %v827 = vsel %vm186, %v826, 0.0
    %828 = vadd.xlane.f32.xlu0 %v827
    %v829 = vpop.xlane.xlu0 %828
    %v830 = vadd.f32 %v824, %v829
    %v831 = vlaneseq
    %v832 = vand.u32 %v831, 127
    %vm833 = vcmp.eq.s32.totalorder %v832, 0
    %v834 = vsel %vm833, %v813, %v830
    %v835 = vld [vmem:[%s7] sm:$0x1]
    %v837 = vperm.slane %v835, 0
    %v839 = vadd.f32 %v834, %v837
    %vm840 = vcmask 15360
    %841 = vst.msk [vmem:[%s8] sm:$0xff] %vm840, %v839
    // Predicated region
    $region58: #{tpu_custom_call.1} parent=1 // pred_check
      _
    $region59: #{tpu_custom_call.1} parent=1 // pred_check_branch
      %843 = sbr.rel (0) target = $region61
    $region60: #{tpu_custom_call.1} parent=1 // pred_region
      _
    $region61: #{tpu_custom_call.1} parent=1 // pred_fallthru
      _
    // Predicated region
    $region62: #{tpu_custom_call.1} parent=1 // pred_check
      _
    $region63: #{tpu_custom_call.1} parent=1 // pred_check_branch
      %845 = sbr.rel (0) target = $region65
    $region64: #{tpu_custom_call.1} parent=1 // pred_region
      _
    $region65: #{tpu_custom_call.1} parent=1 // pred_fallthru
      _
    %846 = vsyncpa [#allocation3], 1
    %847 = vsyncpa [#allocation5], 1
    %848 = vsyncpa [#allocation8], 1
    %849 = vsyncpa [#allocation11], 1

</llo_original>
